<compile_context>
chip_gen: v6e
topology: v6e:2x2x1
jax: 0.10.0
libtpu: 0.0.40
codegen_flags: <defaults>
</compile_context>

<pallas_src>
import functools

import jax
import jax.numpy as jnp
from jax import lax
from jax.experimental import pallas as pl
from jax.experimental.pallas import tpu as pltpu


def _round_up(v, m):
    return ((v + m - 1) // m) * m


# --------------------------------------------------------------------------
# Fused gather-first kernel (grid over the node/contraction axis):
#   acc += A'_rows_tile @ E_tile          (MXU, f32 accumulate)
#   finalize: proj = acc @ W + b ; L2-normalize rows ; store lane-dense slab.
# TODO(synk): BGCNA source not provided; implemented as GCN-style symmetric-normalized
# propagation with `lamda` residual mixing followed by Linear(+bias) -- verify vs. source.
# --------------------------------------------------------------------------
def _gather_first_kernel(adj_ref, emb_ref, w_ref, b_ref, out_ref, acc_ref):
    k = pl.program_id(0)

    @pl.when(k == 0)
    def _():
        acc_ref[...] = jnp.zeros_like(acc_ref)

    # (bp, tk) @ (tk, Fp) -> (bp, Fp)
    acc_ref[...] += jnp.dot(adj_ref[...], emb_ref[...],
                            preferred_element_type=jnp.float32)

    @pl.when(k == pl.num_programs(0) - 1)
    def _():
        mixed = acc_ref[...].astype(w_ref.dtype)                       # (bp, Fp)
        proj = jnp.dot(mixed, w_ref[...],
                       preferred_element_type=jnp.float32) + b_ref[...]  # (bp, Cp)
        # F.normalize(p=2, dim=1, eps=1e-12); padded columns are exactly zero so they
        # do not perturb the sum of squares.  rsqrt -> EUP slot (no sqrt+divide).
        ss = jnp.sum(proj * proj, axis=-1, keepdims=True)
        out_ref[...] = (proj * lax.rsqrt(jnp.maximum(ss, 1e-24))).astype(out_ref.dtype)


# --------------------------------------------------------------------------
# Plain-JAX glue: A' = lamda * D^{-1/2}(A+I)D^{-1/2} + (1-lamda) * I
# (lamda residual folded into the propagation matrix).
# --------------------------------------------------------------------------
def build_propagation_matrix(edge_index, num_nodes, lamda):
    src, dst = edge_index[0], edge_index[1]
    a = jnp.zeros((num_nodes, num_nodes), jnp.float32)
    a = a.at[src, dst].set(1.0)
    a = a.at[dst, src].set(1.0)          # treat graph as undirected
    diag = jnp.arange(num_nodes)
    a = a.at[diag, diag].set(1.0)        # self loops
    deg = jnp.sum(a, axis=1)
    dinv = lax.rsqrt(jnp.maximum(deg, 1e-12))
    a_norm = a * dinv[:, None] * dinv[None, :]
    return lamda * a_norm + (1.0 - lamda) * jnp.eye(num_nodes, dtype=jnp.float32)


# --------------------------------------------------------------------------
# NeighborEmbedding2.forward equivalent (single fused pallas_call, gather-first).
# --------------------------------------------------------------------------
def neighbor_embedding2_forward(x, y, edge_index, embedding, params, lamda=0.8,
                                matmul_dtype=jnp.bfloat16):
    num_nodes, f = embedding.shape
    c = params["w"].shape[1]
    bx, by = x.shape[0], y.shape[0]
    b = bx + by

    # Gather-first: only the (bx+by) rows of A' that feed the consumed outputs.
    adj_prime = build_propagation_matrix(edge_index, num_nodes, lamda)     # (N, N)
    ids = jnp.concatenate([x, y]).astype(jnp.int32)                        # (b,)
    adj_rows = jnp.take(adj_prime, ids, axis=0)                            # (b, N)

    # Contraction (node) axis tiling; padded so every block is (8,128)/(16,128) aligned.
    tk = 512
    if num_nodes <= tk:
        n_pad = _round_up(num_nodes, 128)
        tk = n_pad
    else:
        n_pad = _round_up(num_nodes, tk)
    fp = _round_up(f, 128)
    cp = _round_up(c, 128)
    bp = _round_up(b, 16)   # 16 sublanes -> bf16 tile-aligned and unmasked stores

    # Exact zero padding (padded rows/cols contribute nothing to the matmuls or the norm).
    adj_p = jnp.pad(adj_rows, ((0, bp - b), (0, n_pad - num_nodes))).astype(matmul_dtype)
    emb_p = jnp.pad(embedding.astype(jnp.float32),
                    ((0, n_pad - num_nodes), (0, fp - f))).astype(matmul_dtype)
    w_p = jnp.pad(params["w"].astype(jnp.float32),
                  ((0, fp - f), (0, cp - c))).astype(matmul_dtype)
    b_p = jnp.pad(params["b"].reshape(1, -1).astype(jnp.float32), ((0, 0), (0, cp - c)))

    grid = (n_pad // tk,)

    out_p = pl.pallas_call(
        _gather_first_kernel,
        out_shape=jax.ShapeDtypeStruct((bp, cp), jnp.float32),
        grid=grid,
        in_specs=[
            pl.BlockSpec((bp, tk), lambda k: (0, k)),   # A' rows, K-tiled
            pl.BlockSpec((tk, fp), lambda k: (k, 0)),   # embedding table, K-tiled
            pl.BlockSpec((fp, cp), lambda k: (0, 0)),   # W (fetched once)
            pl.BlockSpec((1, cp), lambda k: (0, 0)),    # bias (fetched once)
        ],
        out_specs=pl.BlockSpec((bp, cp), lambda k: (0, 0)),   # resident across K
        scratch_shapes=[pltpu.VMEM((bp, fp), jnp.float32)],
        compiler_params=pltpu.CompilerParams(
            # K is a reduction axis; with ~14 output rows there is nothing worth
            # splitting across v7x's second TensorCore at this batch size.
            dimension_semantics=("arbitrary",)),
    )(adj_p, emb_p, w_p, b_p)

    # nn.Dropout in inference mode is the identity (no-op here).
    drug = out_p[:bx, :c]
    disease = out_p[bx:b, :c]
    return drug, disease


# --------------------------------------------------------------------------
# Pure-JAX reference (straightforward translation, for correctness check).
# --------------------------------------------------------------------------
def _reference(x, y, edge_index, embedding, params, lamda):
    n = embedding.shape[0]
    src, dst = edge_index[0], edge_index[1]
    a = jnp.zeros((n, n), jnp.float32)
    a = a.at[src, dst].set(1.0)
    a = a.at[dst, src].set(1.0)
    diag = jnp.arange(n)
    a = a.at[diag, diag].set(1.0)
    deg = jnp.sum(a, axis=1)
    dinv = lax.rsqrt(jnp.maximum(deg, 1e-12))
    adj = a * dinv[:, None] * dinv[None, :]

    hp = jax.lax.Precision.HIGHEST
    agg = jnp.dot(adj, embedding, precision=hp)
    mixed = lamda * agg + (1.0 - lamda) * embedding
    proj = jnp.dot(mixed, params["w"], precision=hp) + params["b"].reshape(1, -1)

    def gather_norm(idx):
        r = proj[idx]
        nrm = jnp.sqrt(jnp.sum(r * r, axis=1, keepdims=True))
        return r / jnp.maximum(nrm, 1e-12)

    return gather_norm(x), gather_norm(y)


if __name__ == "__main__":
    key = jax.random.PRNGKey(0)
    num_nodes, num_embeddings, out_channels = 24, 32, 32
    lamda = 0.8

    k1, k2, k3, k4, k5, k6 = jax.random.split(key, 6)
    embedding = jax.random.normal(k1, (num_nodes, num_embeddings), jnp.float32)
    edge_index = jax.random.randint(k2, (2, 40), 0, num_nodes, dtype=jnp.int32)
    x = jax.random.randint(k3, (8,), 0, num_nodes, dtype=jnp.int32)   # drug node ids
    y = jax.random.randint(k4, (6,), 0, num_nodes, dtype=jnp.int32)   # disease node ids

    params = {
        # BGCNA linear projection
        "w": jax.random.normal(k5, (num_embeddings, out_channels), jnp.float32)
             * (1.0 / jnp.sqrt(num_embeddings)),
        "b": jnp.zeros((1, out_channels), jnp.float32),
        # `shutcut` Linear exists in __init__ but is unused in forward; kept for fidelity.
        "shutcut_w": jax.random.normal(k6, (num_embeddings, out_channels), jnp.float32) * 0.01,
        "shutcut_b": jnp.zeros((out_channels,), jnp.float32),
    }

    fwd_bf16 = jax.jit(functools.partial(
        neighbor_embedding2_forward, lamda=lamda, matmul_dtype=jnp.bfloat16))
    fwd_f32 = jax.jit(functools.partial(
        neighbor_embedding2_forward, lamda=lamda, matmul_dtype=jnp.float32))

    drug, disease = fwd_bf16(x, y, edge_index, embedding, params)
    jax.block_until_ready((drug, disease))
    drug32, disease32 = fwd_f32(x, y, edge_index, embedding, params)
    jax.block_until_ready((drug32, disease32))

    assert drug.shape == (8, out_channels) and disease.shape == (6, out_channels)
    assert drug32.shape == (8, out_channels) and disease32.shape == (6, out_channels)

    ref_drug, ref_dis = _reference(x, y, edge_index, embedding, params, lamda)

    # f32-operand path: structurally exact vs. the reference.
    assert jnp.allclose(drug32, ref_drug, atol=1e-3, rtol=1e-3)
    assert jnp.allclose(disease32, ref_dis, atol=1e-3, rtol=1e-3)
    # bf16-operand path (production setting): bf16 input rounding only.
    assert jnp.allclose(drug, ref_drug, atol=3e-2, rtol=3e-2)
    assert jnp.allclose(disease, ref_dis, atol=3e-2, rtol=3e-2)

    print("KERNEL_OK")
</pallas_src>

<mosaic_0001>
module attributes {stable_mosaic.version = 11 : i64} {
  func.func @_gather_first_kernel(%arg0: i32, %arg1: memref<16x128xbf16, #tpu.memory_space<vmem>>, %arg2: memref<128x128xbf16, #tpu.memory_space<vmem>>, %arg3: memref<128x128xbf16, #tpu.memory_space<vmem>>, %arg4: memref<1x128xf32, #tpu.memory_space<vmem>>, %arg5: memref<16x128xf32, #tpu.memory_space<vmem>>, %arg6: memref<16x128xf32, #tpu.memory_space<vmem>>) attributes {dimension_semantics = [#tpu.dimension_semantics<arbitrary>], iteration_bounds = array<i64: 1>, scalar_prefetch = 0 : i64, scratch_operands = 1 : i64, tpu.core_type = #tpu.core_type<tc>, window_params = [{transform_indices = @transform_0, window_bounds = array<i64: 16, 128>}, {transform_indices = @transform_1, window_bounds = array<i64: 128, 128>}, {pipeline_mode = #tpu.pipeline_mode<synchronous>, transform_indices = @transform_2, window_bounds = array<i64: 128, 128>}, {pipeline_mode = #tpu.pipeline_mode<synchronous>, transform_indices = @transform_3, window_bounds = array<i64: 1, 128>}, {pipeline_mode = #tpu.pipeline_mode<synchronous>, transform_indices = @transform_4, window_bounds = array<i64: 16, 128>}]} {
    %c0_i32 = arith.constant 0 : i32
    %0 = arith.cmpi eq, %arg0, %c0_i32 : i32
    %1 = arith.extui %0 : i1 to i32
    %c0_i32_0 = arith.constant 0 : i32
    %2 = arith.cmpi ne, %1, %c0_i32_0 : i32
    scf.if %2 {
      %cst_10 = arith.constant 0.000000e+00 : f32
      %12 = vector.broadcast %cst_10 : f32 to vector<16x128xf32>
      %c0_11 = arith.constant 0 : index
      %c0_12 = arith.constant 0 : index
      %13 = vector.load %arg6[%c0_11, %c0_12] : memref<16x128xf32, #tpu.memory_space<vmem>>, vector<16x128xf32>
      tpu.vector_store %arg6[%c0_11, %c0_12], %12 {strides = array<i32>} : memref<16x128xf32, #tpu.memory_space<vmem>>, vector<16x128xf32>,
    } else {
    }
    %c0 = arith.constant 0 : index
    %c0_1 = arith.constant 0 : index
    %3 = vector.load %arg6[%c0, %c0_1] : memref<16x128xf32, #tpu.memory_space<vmem>>, vector<16x128xf32>
    %c0_2 = arith.constant 0 : index
    %c0_3 = arith.constant 0 : index
    %4 = vector.load %arg1[%c0_2, %c0_3] : memref<16x128xbf16, #tpu.memory_space<vmem>>, vector<16x128xbf16>
    %c0_4 = arith.constant 0 : index
    %c0_5 = arith.constant 0 : index
    %5 = vector.load %arg2[%c0_4, %c0_5] : memref<128x128xbf16, #tpu.memory_space<vmem>>, vector<128x128xbf16>
    %cst = arith.constant dense<0.000000e+00> : vector<16x128xf32>
    %6 = tpu.matmul %4, %5, %cst {dimension_numbers = #tpu.dot_dimension_numbers<[1], [0], [0], [1], [0, 0, 1, 1], [], []>} : vector<16x128xbf16>, vector<128x128xbf16>, vector<16x128xf32> -> vector<16x128xf32>
    %7 = arith.addf %3, %6 : vector<16x128xf32>
    %c0_6 = arith.constant 0 : index
    %c0_7 = arith.constant 0 : index
    %8 = vector.load %arg6[%c0_6, %c0_7] : memref<16x128xf32, #tpu.memory_space<vmem>>, vector<16x128xf32>
    tpu.vector_store %arg6[%c0_6, %c0_7], %7 {strides = array<i32>} : memref<16x128xf32, #tpu.memory_space<vmem>>, vector<16x128xf32>,
    %c0_i32_8 = arith.constant 0 : i32
    %9 = arith.cmpi eq, %arg0, %c0_i32_8 : i32
    %10 = arith.extui %9 : i1 to i32
    %c0_i32_9 = arith.constant 0 : i32
    %11 = arith.cmpi ne, %10, %c0_i32_9 : i32
    scf.if %11 {
      %c0_10 = arith.constant 0 : index
      %c0_11 = arith.constant 0 : index
      %12 = vector.load %arg6[%c0_10, %c0_11] : memref<16x128xf32, #tpu.memory_space<vmem>>, vector<16x128xf32>
      %13 = arith.truncf %12 : vector<16x128xf32> to vector<16x128xbf16>
      %c0_12 = arith.constant 0 : index
      %c0_13 = arith.constant 0 : index
      %14 = vector.load %arg3[%c0_12, %c0_13] : memref<128x128xbf16, #tpu.memory_space<vmem>>, vector<128x128xbf16>
      %cst_14 = arith.constant dense<0.000000e+00> : vector<16x128xf32>
      %15 = tpu.matmul %13, %14, %cst_14 {dimension_numbers = #tpu.dot_dimension_numbers<[1], [0], [0], [1], [0, 0, 1, 1], [], []>} : vector<16x128xbf16>, vector<128x128xbf16>, vector<16x128xf32> -> vector<16x128xf32>
      %c0_15 = arith.constant 0 : index
      %c0_16 = arith.constant 0 : index
      %16 = vector.load %arg4[%c0_15, %c0_16] : memref<1x128xf32, #tpu.memory_space<vmem>>, vector<1x128xf32>
      %17 = vector.broadcast %16 : vector<1x128xf32> to vector<16x128xf32>
      %18 = arith.addf %15, %17 : vector<16x128xf32>
      %19 = arith.mulf %18, %18 : vector<16x128xf32>
      %cst_17 = arith.constant dense<0.000000e+00> : vector<16xf32>
      %20 = vector.multi_reduction <add>, %19, %cst_17 [1] : vector<16x128xf32> to vector<16xf32>
      %21 = vector.shape_cast %20 : vector<16xf32> to vector<16x1xf32>
      %cst_18 = arith.constant 1.000000e-24 : f32
      %22 = vector.broadcast %cst_18 : f32 to vector<16x1xf32>
      %23 = arith.maximumf %21, %22 : vector<16x1xf32>
      %24 = math.rsqrt %23 : vector<16x1xf32>
      %25 = vector.broadcast %24 : vector<16x1xf32> to vector<16x128xf32>
      %26 = arith.mulf %18, %25 : vector<16x128xf32>
      %c0_19 = arith.constant 0 : index
      %c0_20 = arith.constant 0 : index
      %27 = vector.load %arg5[%c0_19, %c0_20] : memref<16x128xf32, #tpu.memory_space<vmem>>, vector<16x128xf32>
      tpu.vector_store %arg5[%c0_19, %c0_20], %26 {strides = array<i32>} : memref<16x128xf32, #tpu.memory_space<vmem>>, vector<16x128xf32>,
    } else {
    }
    return
  }
  func.func @transform_0(%arg0: i32) -> (i32, i32) {
    %c0_i32 = arith.constant 0 : i32
    %c0_i32_0 = arith.constant 0 : i32
    return %c0_i32, %arg0 : i32, i32
  }
  func.func @transform_1(%arg0: i32) -> (i32, i32) {
    %c0_i32 = arith.constant 0 : i32
    %c0_i32_0 = arith.constant 0 : i32
    return %arg0, %c0_i32 : i32, i32
  }
  func.func @transform_2(%arg0: i32) -> (i32, i32) {
    %c0_i32 = arith.constant 0 : i32
    %c0_i32_0 = arith.constant 0 : i32
    %c0_i32_1 = arith.constant 0 : i32
    return %c0_i32, %c0_i32_0 : i32, i32
  }
  func.func @transform_3(%arg0: i32) -> (i32, i32) {
    %c0_i32 = arith.constant 0 : i32
    %c0_i32_0 = arith.constant 0 : i32
    %c0_i32_1 = arith.constant 0 : i32
    return %c0_i32, %c0_i32_0 : i32, i32
  }
  func.func @transform_4(%arg0: i32) -> (i32, i32) {
    %c0_i32 = arith.constant 0 : i32
    %c0_i32_0 = arith.constant 0 : i32
    %c0_i32_1 = arith.constant 0 : i32
    return %c0_i32, %c0_i32_0 : i32, i32
  }
}

</mosaic_0001>

<llo_original>
// kernel: neighbor_embedding2_forward.1
$region0: #{neighbor_embedding2_forward.1}
  #allocation0 [shape = 'u32[]', space=smem, size = 0x4, offset = 0x4, fixed_abs, tag = 'smem constant byte address 0x4 - core index']
  #allocation1 [shape = 'u32[144,128]{1,0:T(1,128)}', space=vmem, size = 0x12000, scoped, tag = 'internal scratch']
  #allocation2 [shape = 'f32[16,128]{1,0:T(8,128)}', space=vmem, size = 0x2000, scoped, tag = 'scratch operand']
  %s0 = inlined_call_operand.vmem [shape: bf16[16,128], index: 0, kind: input, shape index: {}]
  %s1 = inlined_call_operand.vmem [shape: bf16[128,128], index: 1, kind: input, shape index: {}]
  %s2 = inlined_call_operand.vmem [shape: bf16[128,128], index: 2, kind: input, shape index: {}]
  %s3 = inlined_call_operand.vmem [shape: f32[1,128], index: 3, kind: input, shape index: {}]
  %s4 = inlined_call_operand.vmem [shape: f32[16,128], index: 4, kind: output, shape index: {}]
  %s5 = sld [smem:[#allocation0]]
  $region34: #{neighbor_embedding2_forward.1} parent=0
    _
  %s7 = ssub.s32 1, %s5
  %s8 = scalar_select 0, %s7, %s5
  // Predicated region
  $region2: #{neighbor_embedding2_forward.1} parent=0 // pred_check
    _
  $region3: #{neighbor_embedding2_forward.1} parent=0 // pred_check_branch
    %10 = sbr.rel (0) target = $region5
  $region4: #{neighbor_embedding2_forward.1} parent=0 // pred_region
    _
  $region5: #{neighbor_embedding2_forward.1} parent=0 // pred_fallthru
    _
  // Predicated region
  $region6: #{neighbor_embedding2_forward.1} parent=0 // pred_check
    _
  $region7: #{neighbor_embedding2_forward.1} parent=0 // pred_check_branch
    %12 = sbr.rel (0) target = $region9
  $region8: #{neighbor_embedding2_forward.1} parent=0 // pred_region
    _
  $region9: #{neighbor_embedding2_forward.1} parent=0 // pred_fallthru
    _
  // Predicated region
  $region10: #{neighbor_embedding2_forward.1} parent=0 // pred_check
    _
  $region11: #{neighbor_embedding2_forward.1} parent=0 // pred_check_branch
    %14 = sbr.rel (0) target = $region13
  $region12: #{neighbor_embedding2_forward.1} parent=0 // pred_region
    _
  $region13: #{neighbor_embedding2_forward.1} parent=0 // pred_fallthru
    _
  // Predicated region
  $region14: #{neighbor_embedding2_forward.1} parent=0 // pred_check
    _
  $region15: #{neighbor_embedding2_forward.1} parent=0 // pred_check_branch
    %16 = sbr.rel (0) target = $region17
  $region16: #{neighbor_embedding2_forward.1} parent=0 // pred_region
    _
  $region17: #{neighbor_embedding2_forward.1} parent=0 // pred_fallthru
    _
  %p18 = scmp.eq.s32.totalorder 0, 0
  // Predicated region
  $region18: #{neighbor_embedding2_forward.1} parent=0 // pred_check
    %p19 = pneg %p18
  $region19: #{neighbor_embedding2_forward.1} parent=0 // pred_check_branch
    %21 = sbr.rel (%p19) target = $region21
  $region20: #{neighbor_embedding2_forward.1} parent=0 // pred_region
    %22 = vst [vmem:[#allocation2] sm:$0xff] 0.0
    %23 = vst [vmem:[#allocation2 + $0x8] sm:$0xff] 0.0
  $region21: #{neighbor_embedding2_forward.1} parent=0 // pred_fallthru
    _
  %v24 = vld [vmem:[#allocation2] sm:$0xff]
  %v25 = vld [vmem:[#allocation2 + $0x8] sm:$0xff]
  %v26 = vld [vmem:[%s0] sm:$0xf]
  %v27 = vld [vmem:[%s0 + $0x4] sm:$0xf]
  %v28 = vld [vmem:[%s1] sm:$0xf]
  %v29 = vld [vmem:[%s1 + $0x4] sm:$0xf]
  %v30 = vld [vmem:[%s1 + $0x8] sm:$0xf]
  %v31 = vld [vmem:[%s1 + $0xc] sm:$0xf]
  %v32 = vld [vmem:[%s1 + $0x10] sm:$0xf]
  %v33 = vld [vmem:[%s1 + $0x14] sm:$0xf]
  %v34 = vld [vmem:[%s1 + $0x18] sm:$0xf]
  %v35 = vld [vmem:[%s1 + $0x1c] sm:$0xf]
  %v36 = vld [vmem:[%s1 + $0x20] sm:$0xf]
  %v37 = vld [vmem:[%s1 + $0x24] sm:$0xf]
  %v38 = vld [vmem:[%s1 + $0x28] sm:$0xf]
  %v39 = vld [vmem:[%s1 + $0x2c] sm:$0xf]
  %v40 = vld [vmem:[%s1 + $0x30] sm:$0xf]
  %v41 = vld [vmem:[%s1 + $0x34] sm:$0xf]
  %v42 = vld [vmem:[%s1 + $0x38] sm:$0xf]
  %v43 = vld [vmem:[%s1 + $0x3c] sm:$0xf]
  %v46 = vunpack.c.l.b16 %v26
  %v47 = vunpack.c.l.b16 %v27
  %v48 = vpack.c.b16 %v47, %v46
  %v66 = vunpack.c.l.b16 %v28
  %v67 = vunpack.c.l.b16 %v29
  %v68 = vunpack.c.l.b16 %v30
  %v69 = vunpack.c.l.b16 %v31
  %v70 = vunpack.c.l.b16 %v32
  %v71 = vunpack.c.l.b16 %v33
  %v72 = vunpack.c.l.b16 %v34
  %v73 = vunpack.c.l.b16 %v35
  %v74 = vunpack.c.l.b16 %v36
  %v75 = vunpack.c.l.b16 %v37
  %v76 = vunpack.c.l.b16 %v38
  %v77 = vunpack.c.l.b16 %v39
  %v78 = vunpack.c.l.b16 %v40
  %v79 = vunpack.c.l.b16 %v41
  %v80 = vunpack.c.l.b16 %v42
  %v81 = vunpack.c.l.b16 %v43
  %v82 = vpack.c.b16 %v67, %v66
  %v83 = vpack.c.b16 %v69, %v68
  %v84 = vpack.c.b16 %v71, %v70
  %v85 = vpack.c.b16 %v73, %v72
  %v86 = vpack.c.b16 %v75, %v74
  %v87 = vpack.c.b16 %v77, %v76
  %v88 = vpack.c.b16 %v79, %v78
  %v89 = vpack.c.b16 %v81, %v80
  %98 = vmatprep.subr.bf16.mxu0 0
  %99 = vmatpush1.bf16.msra.mxu0 %v89
  %100 = vmatprep.subr.bf16.mxu0 0
  %101 = vmatpush1.bf16.msra.mxu0 %v88
  %102 = vmatprep.subr.bf16.mxu0 0
  %103 = vmatpush1.bf16.msra.mxu0 %v87
  %104 = vmatprep.subr.bf16.mxu0 0
  %105 = vmatpush1.bf16.msra.mxu0 %v86
  %106 = vmatprep.subr.bf16.mxu0 0
  %107 = vmatpush1.bf16.msra.mxu0 %v85
  %108 = vmatprep.subr.bf16.mxu0 0
  %109 = vmatpush1.bf16.msra.mxu0 %v84
  %110 = vmatprep.subr.bf16.mxu0 0
  %111 = vmatpush1.bf16.msra.mxu0 %v83
  %112 = vmatprep.subr.bf16.mxu0 0
  %113 = vmatpush1.bf16.msra.mxu0 %v82
  %114 = vmatprep.subr.bf16.mxu0 0
  %115 = vmatpush2.bf16.msra.mxu0 0
  %116 = vmatprep.subr.bf16.mxu0 0
  %117 = vmatpush2.bf16.msra.mxu0 0
  %118 = vmatprep.subr.bf16.mxu0 0
  %119 = vmatpush2.bf16.msra.mxu0 0
  %120 = vmatprep.subr.bf16.mxu0 0
  %121 = vmatpush2.bf16.msra.mxu0 0
  %122 = vmatprep.subr.bf16.mxu0 0
  %123 = vmatpush2.bf16.msra.mxu0 0
  %124 = vmatprep.subr.bf16.mxu0 0
  %125 = vmatpush2.bf16.msra.mxu0 0
  %126 = vmatprep.subr.bf16.mxu0 0
  %127 = vmatpush2.bf16.msra.mxu0 0
  %128 = vmatprep.subr.bf16.mxu0 0
  %129 = vmatpush2.bf16.msra.mxu0 0
  %130 = vmatprep.mubr.bf16.mxu0 0
  %131 = vmatmul.mubr.bf16.gmra.mxu0 %v48
  %v132 = vpop.f32.mrf.mxu0
  %v133 = vadd.f32 0.0, %v132
  %v134 = vpop.f32.mrf.mxu0
  %v135 = vpop.f32.mrf.mxu0
  %v136 = vadd.f32 0.0, %v135
  %v137 = vpop.f32.mrf.mxu0
  %138 = vdwg.mxu0
  %v139 = vadd.f32 %v24, %v133
  %v140 = vadd.f32 %v25, %v136
  %141 = vst [vmem:[#allocation2] sm:$0xff] %v139
  %142 = vst [vmem:[#allocation2 + $0x8] sm:$0xff] %v140
  // Predicated region
  $region22: #{neighbor_embedding2_forward.1} parent=0 // pred_check
    %p143 = pneg %p18
  $region23: #{neighbor_embedding2_forward.1} parent=0 // pred_check_branch
    %145 = sbr.rel (%p143) target = $region25
  $region24: #{neighbor_embedding2_forward.1} parent=0 // pred_region
    %v146 = vld [vmem:[#allocation2] sm:$0xff]
    %v147 = vld [vmem:[#allocation2 + $0x8] sm:$0xff]
    %v148 = vpack.c.bf16 %v147, %v146
    %v149 = vld [vmem:[%s2] sm:$0xf]
    %v150 = vld [vmem:[%s2 + $0x4] sm:$0xf]
    %v151 = vld [vmem:[%s2 + $0x8] sm:$0xf]
    %v152 = vld [vmem:[%s2 + $0xc] sm:$0xf]
    %v153 = vld [vmem:[%s2 + $0x10] sm:$0xf]
    %v154 = vld [vmem:[%s2 + $0x14] sm:$0xf]
    %v155 = vld [vmem:[%s2 + $0x18] sm:$0xf]
    %v156 = vld [vmem:[%s2 + $0x1c] sm:$0xf]
    %v157 = vld [vmem:[%s2 + $0x20] sm:$0xf]
    %v158 = vld [vmem:[%s2 + $0x24] sm:$0xf]
    %v159 = vld [vmem:[%s2 + $0x28] sm:$0xf]
    %v160 = vld [vmem:[%s2 + $0x2c] sm:$0xf]
    %v161 = vld [vmem:[%s2 + $0x30] sm:$0xf]
    %v162 = vld [vmem:[%s2 + $0x34] sm:$0xf]
    %v163 = vld [vmem:[%s2 + $0x38] sm:$0xf]
    %v164 = vld [vmem:[%s2 + $0x3c] sm:$0xf]
    %v165 = vld [vmem:[%s3] sm:$0x1]
    %v167 = vlaneseq
    %v168 = vshrl.u32 %v167, 7
    %v169 = vsub.s32 0, %v168
    %v170 = vrot.slane %v165, %v169
    %v188 = vunpack.c.l.b16 %v149
    %v189 = vunpack.c.l.b16 %v150
    %v190 = vunpack.c.l.b16 %v151
    %v191 = vunpack.c.l.b16 %v152
    %v192 = vunpack.c.l.b16 %v153
    %v193 = vunpack.c.l.b16 %v154
    %v194 = vunpack.c.l.b16 %v155
    %v195 = vunpack.c.l.b16 %v156
    %v196 = vunpack.c.l.b16 %v157
    %v197 = vunpack.c.l.b16 %v158
    %v198 = vunpack.c.l.b16 %v159
    %v199 = vunpack.c.l.b16 %v160
    %v200 = vunpack.c.l.b16 %v161
    %v201 = vunpack.c.l.b16 %v162
    %v202 = vunpack.c.l.b16 %v163
    %v203 = vunpack.c.l.b16 %v164
    %v204 = vpack.c.b16 %v189, %v188
    %v205 = vpack.c.b16 %v191, %v190
    %v206 = vpack.c.b16 %v193, %v192
    %v207 = vpack.c.b16 %v195, %v194
    %v208 = vpack.c.b16 %v197, %v196
    %v209 = vpack.c.b16 %v199, %v198
    %v210 = vpack.c.b16 %v201, %v200
    %v211 = vpack.c.b16 %v203, %v202
    %220 = vmatprep.subr.bf16.mxu0 0
    %221 = vmatpush1.bf16.msra.mxu0 %v211
    %222 = vmatprep.subr.bf16.mxu0 0
    %223 = vmatpush1.bf16.msra.mxu0 %v210
    %224 = vmatprep.subr.bf16.mxu0 0
    %225 = vmatpush1.bf16.msra.mxu0 %v209
    %226 = vmatprep.subr.bf16.mxu0 0
    %227 = vmatpush1.bf16.msra.mxu0 %v208
    %228 = vmatprep.subr.bf16.mxu0 0
    %229 = vmatpush1.bf16.msra.mxu0 %v207
    %230 = vmatprep.subr.bf16.mxu0 0
    %231 = vmatpush1.bf16.msra.mxu0 %v206
    %232 = vmatprep.subr.bf16.mxu0 0
    %233 = vmatpush1.bf16.msra.mxu0 %v205
    %234 = vmatprep.subr.bf16.mxu0 0
    %235 = vmatpush1.bf16.msra.mxu0 %v204
    %236 = vmatprep.subr.bf16.mxu0 0
    %237 = vmatpush2.bf16.msra.mxu0 0
    %238 = vmatprep.subr.bf16.mxu0 0
    %239 = vmatpush2.bf16.msra.mxu0 0
    %240 = vmatprep.subr.bf16.mxu0 0
    %241 = vmatpush2.bf16.msra.mxu0 0
    %242 = vmatprep.subr.bf16.mxu0 0
    %243 = vmatpush2.bf16.msra.mxu0 0
    %244 = vmatprep.subr.bf16.mxu0 0
    %245 = vmatpush2.bf16.msra.mxu0 0
    %246 = vmatprep.subr.bf16.mxu0 0
    %247 = vmatpush2.bf16.msra.mxu0 0
    %248 = vmatprep.subr.bf16.mxu0 0
    %249 = vmatpush2.bf16.msra.mxu0 0
    %250 = vmatprep.subr.bf16.mxu0 0
    %251 = vmatpush2.bf16.msra.mxu0 0
    %252 = vmatprep.mubr.bf16.mxu0 0
    %253 = vmatmul.mubr.bf16.gmra.mxu0 %v148
    %v254 = vpop.f32.mrf.mxu0
    %v255 = vadd.f32 %v170, %v254
    %v256 = vpop.f32.mrf.mxu0
    %v257 = vpop.f32.mrf.mxu0
    %v258 = vadd.f32 %v170, %v257
    %v259 = vpop.f32.mrf.mxu0
    %260 = vdwg.mxu0
    %v261 = vmul.f32 %v255, %v255
    %v262 = vmul.f32 %v258, %v258
    %263 = vadd.xlane.f32.xlu0 %v261
    %v264 = vpop.xlane.xlu0 %263
    %265 = vadd.xlane.f32.xlu0 %v262
    %v266 = vpop.xlane.xlu0 %265
    %v267 = vmax.f32 %v264, 1e-24
    %v268 = vmax.f32 %v266, 1e-24
    %v269 = vrsqrt.pop %v267
    %v270 = vrsqrt.pop %v268
    %v271 = vmul.f32 %v255, %v269
    %v272 = vmul.f32 %v258, %v270
    %273 = vst [vmem:[%s4] sm:$0xff] %v271
    %274 = vst [vmem:[%s4 + $0x8] sm:$0xff] %v272
  $region25: #{neighbor_embedding2_forward.1} parent=0 // pred_fallthru
    _
  // Predicated region
  $region26: #{neighbor_embedding2_forward.1} parent=0 // pred_check
    _
  $region27: #{neighbor_embedding2_forward.1} parent=0 // pred_check_branch
    %276 = sbr.rel (0) target = $region29
  $region28: #{neighbor_embedding2_forward.1} parent=0 // pred_region
    _
  $region29: #{neighbor_embedding2_forward.1} parent=0 // pred_fallthru
    _
  // Predicated region
  $region30: #{neighbor_embedding2_forward.1} parent=0 // pred_check
    _
  $region31: #{neighbor_embedding2_forward.1} parent=0 // pred_check_branch
    %278 = sbr.rel (0) target = $region33
  $region32: #{neighbor_embedding2_forward.1} parent=0 // pred_region
    _
  $region33: #{neighbor_embedding2_forward.1} parent=0 // pred_fallthru
    _

</llo_original>
